<compile_context>
chip_gen: v5e
topology: v5e:2x2
jax: 0.10.0
libtpu: 0.0.40
codegen_flags: <defaults>
</compile_context>

<pallas_src>
import jax
import jax.numpy as jnp
from jax.experimental import pallas as pl
from jax.experimental.pallas import tpu as pltpu


def _round_up(x, m):
    return (x + m - 1) // m * m


def actor_critic_kernel(x_ref, w1_ref, b1_ref, w2_ref, b2_ref, out_ref):
    """Fused actor+critic 2-layer MLP, transposed (batch on the lane axis).

    x_ref   : (D,  TB)   state^T                     -- lane-dense loads
    w1_ref  : (2H, D)    [W1a ; W1c]^T                -- one first-layer matmul
    b1_ref  : (2H, 1)    f32 first-layer biases
    w2_ref  : (Op, 2H)   block-diag [W2a | W2c]^T, sublane-padded to Op
    b2_ref  : (Op, 1)    f32 second-layer biases (padded rows are zero)
    out_ref : (Op, TB)   rows [:A] = logits^T, row [A] = value^T (lane-dense)
    """
    # TODO(synk): nn.Dropout is identity in eval mode; training-mode dropout
    # (pltpu.prng_* + mask) is not modeled.
    x = x_ref[...].astype(w1_ref.dtype)            # bf16 (or f32) MXU inputs
    h = jnp.dot(w1_ref[...], x, preferred_element_type=jnp.float32)
    h = jnp.maximum(h + b1_ref[...], 0.0)          # bias add + ReLU kept in f32
    out_ref[...] = (
        jnp.dot(w2_ref[...], h.astype(w2_ref.dtype),
                preferred_element_type=jnp.float32)
        + b2_ref[...]
    )


def fuse_params(p, compute_dtype=jnp.bfloat16):
    """Fuse actor+critic weights into transposed, MXU-friendly operands.

      W1^T = [W1a^T ; W1c^T]                        (2H, D)
      W2^T = [[W2a^T, 0], [0, W2c^T]] padded to Op  (Op, 2H), Op = round_up(A+1, 8)

    Dot operands are stored in `compute_dtype` (bf16 by default); biases stay
    f32 so elementwise work remains on the f32 VPU path (v5e has no bf16 VALU).
    """
    D, H = p["w1a"].shape
    A = p["w2a"].shape[1]
    Op = _round_up(A + 1, 8)                       # sublane-dense output rows

    w1t = jnp.concatenate([p["w1a"].T, p["w1c"].T], axis=0).astype(compute_dtype)
    b1t = jnp.concatenate([p["b1a"], p["b1c"]], axis=1).T.astype(jnp.float32)

    w2t = jnp.zeros((Op, 2 * H), jnp.float32)
    w2t = w2t.at[:A, :H].set(p["w2a"].T)
    w2t = w2t.at[A:A + 1, H:].set(p["w2c"].T)
    w2t = w2t.astype(compute_dtype)

    b2t = jnp.zeros((Op, 1), jnp.float32)
    b2t = b2t.at[:A, :].set(p["b2a"].T)
    b2t = b2t.at[A:A + 1, :].set(p["b2c"].T)
    return w1t, b1t, w2t, b2t


def actor_critic_forward(state, w1t, b1t, w2t, b2t, num_actions, *, tile_b=4096):
    """Fused Pallas forward. state: (B, D) f32 -> (logits (B, A), value (B, 1))."""
    B, D = state.shape
    H2 = w1t.shape[0]          # 2 * hidden
    Op = w2t.shape[0]          # round_up(A + 1, 8)

    # Batch lives on the lane axis -> 128-aligned tiles, lane-dense loads/stores.
    tile_b = max(128, _round_up(tile_b, 128))
    Bp128 = _round_up(B, 128)
    # Keep >=2 grid steps whenever the batch spans more than one 128-lane tile
    # so v7x's two TensorCores both get work on the "parallel" axis.
    half = max(128, _round_up(pl.cdiv(Bp128, 2), 128))
    tb = min(tile_b, half if Bp128 > 128 else 128)
    Bp = _round_up(B, tb)

    # Transpose + pad in the wrapper (layout plumbing); cast the dominant HBM
    # stream to the fused-weight dtype here so its DMA bytes are already halved.
    xT = jnp.pad(state, ((0, Bp - B), (0, 0))).T.astype(w1t.dtype)   # (D, Bp)

    flops = 2 * Bp * (D * H2 + H2 * Op)
    bytes_accessed = (
        xT.size * xT.dtype.itemsize + Bp * Op * 4
        + w1t.size * w1t.dtype.itemsize + w2t.size * w2t.dtype.itemsize
        + (H2 + Op) * 4)

    outT = pl.pallas_call(
        actor_critic_kernel,
        out_shape=jax.ShapeDtypeStruct((Op, Bp), jnp.float32),
        grid=(Bp // tb,),
        in_specs=[
            pl.BlockSpec((D, tb), lambda i: (0, i)),     # x^T: streamed, lane-dense
            pl.BlockSpec((H2, D), lambda i: (0, 0)),     # fused W1^T: resident
            pl.BlockSpec((H2, 1), lambda i: (0, 0)),     # fused b1:   resident
            pl.BlockSpec((Op, H2), lambda i: (0, 0)),    # fused W2^T: resident
            pl.BlockSpec((Op, 1), lambda i: (0, 0)),     # fused b2:   resident
        ],
        out_specs=pl.BlockSpec((Op, tb), lambda i: (0, i)),   # lane-dense stores
        compiler_params=pltpu.CompilerParams(
            dimension_semantics=("parallel",),           # shard batch across TCs
        ),
        cost_estimate=pl.CostEstimate(
            flops=flops, transcendentals=0, bytes_accessed=bytes_accessed),
    )(xT, w1t, b1t, w2t, b2t)

    out = outT[:, :B].T                                  # (B, Op), drop batch pad
    return out[:, :num_actions], out[:, num_actions:num_actions + 1]


def init_params(key, in_dim, hidden_dim, action_dim):
    """Deterministic parameter init (shapes match the torch Linear layers)."""
    ks = jax.random.split(key, 8)
    s1 = 1.0 / jnp.sqrt(in_dim)
    s2 = 1.0 / jnp.sqrt(hidden_dim)
    return {
        # actor MLP
        "w1a": jax.random.uniform(ks[0], (in_dim, hidden_dim), jnp.float32, -s1, s1),
        "b1a": jax.random.uniform(ks[1], (1, hidden_dim), jnp.float32, -s1, s1),
        "w2a": jax.random.uniform(ks[2], (hidden_dim, action_dim), jnp.float32, -s2, s2),
        "b2a": jax.random.uniform(ks[3], (1, action_dim), jnp.float32, -s2, s2),
        # critic MLP
        "w1c": jax.random.uniform(ks[4], (in_dim, hidden_dim), jnp.float32, -s1, s1),
        "b1c": jax.random.uniform(ks[5], (1, hidden_dim), jnp.float32, -s1, s1),
        "w2c": jax.random.uniform(ks[6], (hidden_dim, 1), jnp.float32, -s2, s2),
        "b2c": jax.random.uniform(ks[7], (1, 1), jnp.float32, -s2, s2),
    }


def actor_critic_ref(state, p):
    """Pure-JAX unfused reference for correctness checking."""
    ha = jnp.maximum(state @ p["w1a"] + p["b1a"], 0.0)
    act = ha @ p["w2a"] + p["b2a"]
    hc = jnp.maximum(state @ p["w1c"] + p["b1c"], 0.0)
    val = hc @ p["w2c"] + p["b2c"]
    return act, val


if __name__ == "__main__":
    # Small PPO-like shapes: CartPole-ish observation dim 4, 2 actions.
    B, D, H, A = 8, 4, 32, 2

    key = jax.random.PRNGKey(0)
    k_state, k_params, k_big = jax.random.split(key, 3)

    state = jax.random.normal(k_state, (B, D), dtype=jnp.float32)
    params = init_params(k_params, D, H, A)
    act_ref, val_ref = actor_critic_ref(state, params)

    # --- f32 dot inputs, single-tile case (tight tolerance) ---
    w1t, b1t, w2t, b2t = fuse_params(params, compute_dtype=jnp.float32)
    action_pred, value_pred = jax.block_until_ready(
        actor_critic_forward(state, w1t, b1t, w2t, b2t, A))
    assert action_pred.shape == (B, A) and value_pred.shape == (B, 1)
    assert jnp.allclose(action_pred, act_ref, atol=1e-5, rtol=1e-5)
    assert jnp.allclose(value_pred, val_ref, atol=1e-5, rtol=1e-5)

    # --- bf16 dot inputs (v6e/v7x fast path), multi-tile + padded-batch case ---
    B2 = 600  # not a multiple of the tile -> padding path; grid has >1 step
    state2 = jax.random.normal(k_big, (B2, D), dtype=jnp.float32)
    a2_ref, v2_ref = actor_critic_ref(state2, params)
    w1b, b1b, w2b, b2b = fuse_params(params, compute_dtype=jnp.bfloat16)
    a2, v2 = jax.block_until_ready(
        actor_critic_forward(state2, w1b, b1b, w2b, b2b, A, tile_b=256))
    assert a2.shape == (B2, A) and v2.shape == (B2, 1)
    assert jnp.allclose(a2, a2_ref, atol=3e-2, rtol=3e-2)
    assert jnp.allclose(v2, v2_ref, atol=3e-2, rtol=3e-2)

    print("KERNEL_OK")
</pallas_src>

<mosaic_0001>
module attributes {stable_mosaic.version = 11 : i64} {
  func.func @actor_critic_kernel(%arg0: i32, %arg1: memref<4x128xf32, #tpu.memory_space<vmem>>, %arg2: memref<64x4xf32, #tpu.memory_space<vmem>>, %arg3: memref<64x1xf32, #tpu.memory_space<vmem>>, %arg4: memref<8x64xf32, #tpu.memory_space<vmem>>, %arg5: memref<8x1xf32, #tpu.memory_space<vmem>>, %arg6: memref<8x128xf32, #tpu.memory_space<vmem>>) attributes {dimension_semantics = [#tpu.dimension_semantics<parallel>], iteration_bounds = array<i64: 1>, scalar_prefetch = 0 : i64, scratch_operands = 0 : i64, tpu.core_type = #tpu.core_type<tc>, window_params = [{transform_indices = @transform_0, window_bounds = array<i64: 4, 128>}, {pipeline_mode = #tpu.pipeline_mode<synchronous>, transform_indices = @transform_1, window_bounds = array<i64: 64, 4>}, {pipeline_mode = #tpu.pipeline_mode<synchronous>, transform_indices = @transform_2, window_bounds = array<i64: 64, 1>}, {pipeline_mode = #tpu.pipeline_mode<synchronous>, transform_indices = @transform_3, window_bounds = array<i64: 8, 64>}, {pipeline_mode = #tpu.pipeline_mode<synchronous>, transform_indices = @transform_4, window_bounds = array<i64: 8, 1>}, {transform_indices = @transform_5, window_bounds = array<i64: 8, 128>}]} {
    %c0 = arith.constant 0 : index
    %c0_0 = arith.constant 0 : index
    %0 = vector.load %arg1[%c0, %c0_0] : memref<4x128xf32, #tpu.memory_space<vmem>>, vector<4x128xf32>
    %c0_1 = arith.constant 0 : index
    %c0_2 = arith.constant 0 : index
    %1 = vector.load %arg2[%c0_1, %c0_2] : memref<64x4xf32, #tpu.memory_space<vmem>>, vector<64x4xf32>
    %cst = arith.constant dense<0.000000e+00> : vector<64x128xf32>
    %2 = tpu.matmul %1, %0, %cst {dimension_numbers = #tpu.dot_dimension_numbers<[1], [0], [0], [1], [0, 0, 1, 1], [], []>} : vector<64x4xf32>, vector<4x128xf32>, vector<64x128xf32> -> vector<64x128xf32>
    %c0_3 = arith.constant 0 : index
    %c0_4 = arith.constant 0 : index
    %3 = vector.load %arg3[%c0_3, %c0_4] : memref<64x1xf32, #tpu.memory_space<vmem>>, vector<64x1xf32>
    %4 = vector.broadcast %3 : vector<64x1xf32> to vector<64x128xf32>
    %5 = arith.addf %2, %4 : vector<64x128xf32>
    %cst_5 = arith.constant 0.000000e+00 : f32
    %6 = vector.broadcast %cst_5 : f32 to vector<64x128xf32>
    %7 = arith.maximumf %5, %6 : vector<64x128xf32>
    %c0_6 = arith.constant 0 : index
    %c0_7 = arith.constant 0 : index
    %8 = vector.load %arg4[%c0_6, %c0_7] : memref<8x64xf32, #tpu.memory_space<vmem>>, vector<8x64xf32>
    %cst_8 = arith.constant dense<0.000000e+00> : vector<8x128xf32>
    %9 = tpu.matmul %8, %7, %cst_8 {dimension_numbers = #tpu.dot_dimension_numbers<[1], [0], [0], [1], [0, 0, 1, 1], [], []>} : vector<8x64xf32>, vector<64x128xf32>, vector<8x128xf32> -> vector<8x128xf32>
    %c0_9 = arith.constant 0 : index
    %c0_10 = arith.constant 0 : index
    %10 = vector.load %arg5[%c0_9, %c0_10] : memref<8x1xf32, #tpu.memory_space<vmem>>, vector<8x1xf32>
    %11 = vector.broadcast %10 : vector<8x1xf32> to vector<8x128xf32>
    %12 = arith.addf %9, %11 : vector<8x128xf32>
    %c0_11 = arith.constant 0 : index
    %c0_12 = arith.constant 0 : index
    %13 = vector.load %arg6[%c0_11, %c0_12] : memref<8x128xf32, #tpu.memory_space<vmem>>, vector<8x128xf32>
    tpu.vector_store %arg6[%c0_11, %c0_12], %12 {strides = array<i32>} : memref<8x128xf32, #tpu.memory_space<vmem>>, vector<8x128xf32>,
    return
  }
  func.func @transform_0(%arg0: i32) -> (i32, i32) {
    %c0_i32 = arith.constant 0 : i32
    %c0_i32_0 = arith.constant 0 : i32
    return %c0_i32, %arg0 : i32, i32
  }
  func.func @transform_1(%arg0: i32) -> (i32, i32) {
    %c0_i32 = arith.constant 0 : i32
    %c0_i32_0 = arith.constant 0 : i32
    %c0_i32_1 = arith.constant 0 : i32
    return %c0_i32, %c0_i32_0 : i32, i32
  }
  func.func @transform_2(%arg0: i32) -> (i32, i32) {
    %c0_i32 = arith.constant 0 : i32
    %c0_i32_0 = arith.constant 0 : i32
    %c0_i32_1 = arith.constant 0 : i32
    return %c0_i32, %c0_i32_0 : i32, i32
  }
  func.func @transform_3(%arg0: i32) -> (i32, i32) {
    %c0_i32 = arith.constant 0 : i32
    %c0_i32_0 = arith.constant 0 : i32
    %c0_i32_1 = arith.constant 0 : i32
    return %c0_i32, %c0_i32_0 : i32, i32
  }
  func.func @transform_4(%arg0: i32) -> (i32, i32) {
    %c0_i32 = arith.constant 0 : i32
    %c0_i32_0 = arith.constant 0 : i32
    %c0_i32_1 = arith.constant 0 : i32
    return %c0_i32, %c0_i32_0 : i32, i32
  }
  func.func @transform_5(%arg0: i32) -> (i32, i32) {
    %c0_i32 = arith.constant 0 : i32
    %c0_i32_0 = arith.constant 0 : i32
    return %c0_i32, %arg0 : i32, i32
  }
}

</mosaic_0001>

<llo_original>
// kernel: tpu_custom_call.1
$region0: #{tpu_custom_call.1}
  #allocation0 [shape = 'u32[]', space=smem, size = 0x4, offset = 0x4, fixed_abs, tag = 'smem constant byte address 0x4 - core index']
  #allocation1 [shape = 'u32[72,128]{1,0:T(1,128)}', space=vmem, size = 0x9000, scoped, tag = 'internal scratch']
  %s0 = inlined_call_operand.vmem [shape: f32[4,128], index: 0, kind: input, shape index: {}]
  %s1 = inlined_call_operand.vmem [shape: f32[64,4], index: 1, kind: input, shape index: {}]
  %s2 = inlined_call_operand.vmem [shape: f32[64,1], index: 2, kind: input, shape index: {}]
  %s3 = inlined_call_operand.vmem [shape: f32[8,64], index: 3, kind: input, shape index: {}]
  %s4 = inlined_call_operand.vmem [shape: f32[8,1], index: 4, kind: input, shape index: {}]
  %s5 = inlined_call_operand.hbm [shape: f32[8,128], index: 5, kind: output, shape index: {}]
  %s6 = sld [smem:[#allocation0]]
  $region30: #{tpu_custom_call.1} parent=0
    _
  %s8 = ssub.s32 1, %s6
  %s9 = scalar_select 0, %s8, %s6
  $region1: #{tpu_custom_call.1} parent=0
    #allocation2 [shape = 'u8[4096]{0}', space=vmem, size = 0x1000, scoped, tag = 'output window, operand 0, single buffered']
    #allocation3 [shape = 's32[1]{0}', space=sflag, size = 0x4, scoped, tag = 'scoped memory for tpu_custom_call.1']
    %10 = vsyncpa [#allocation3], 0
    // Predicated region
    $region2: #{tpu_custom_call.1} parent=1 // pred_check
      _
    $region3: #{tpu_custom_call.1} parent=1 // pred_check_branch
      %12 = sbr.rel (0) target = $region5
    $region4: #{tpu_custom_call.1} parent=1 // pred_region
      _
    $region5: #{tpu_custom_call.1} parent=1 // pred_fallthru
      _
    // Predicated region
    $region6: #{tpu_custom_call.1} parent=1 // pred_check
      _
    $region7: #{tpu_custom_call.1} parent=1 // pred_check_branch
      %14 = sbr.rel (0) target = $region9
    $region8: #{tpu_custom_call.1} parent=1 // pred_region
      _
    $region9: #{tpu_custom_call.1} parent=1 // pred_fallthru
      _
    // Predicated region
    $region10: #{tpu_custom_call.1} parent=1 // pred_check
      _
    $region11: #{tpu_custom_call.1} parent=1 // pred_check_branch
      %16 = sbr.rel (0) target = $region13
    $region12: #{tpu_custom_call.1} parent=1 // pred_region
      _
    $region13: #{tpu_custom_call.1} parent=1 // pred_fallthru
      _
    // Predicated region
    $region14: #{tpu_custom_call.1} parent=1 // pred_check
      _
    $region15: #{tpu_custom_call.1} parent=1 // pred_check_branch
      %18 = sbr.rel (0) target = $region17
    $region16: #{tpu_custom_call.1} parent=1 // pred_region
      _
    $region17: #{tpu_custom_call.1} parent=1 // pred_fallthru
      _
    // Predicated region
    $region18: #{tpu_custom_call.1} parent=1 // pred_check
      _
    $region19: #{tpu_custom_call.1} parent=1 // pred_check_branch
      %20 = sbr.rel (0) target = $region21
    $region20: #{tpu_custom_call.1} parent=1 // pred_region
      _
    $region21: #{tpu_custom_call.1} parent=1 // pred_fallthru
      _
    %v21 = vld [vmem:[%s0] sm:$0xf]
    %v22 = vld [vmem:[%s1] sm:$0xff]
    %v23 = vld [vmem:[%s1 + $0x8] sm:$0xff]
    %v24 = vld [vmem:[%s1 + $0x10] sm:$0xff]
    %v25 = vld [vmem:[%s1 + $0x18] sm:$0xff]
    %v26 = vld [vmem:[%s1 + $0x20] sm:$0xff]
    %v27 = vld [vmem:[%s1 + $0x28] sm:$0xff]
    %v28 = vld [vmem:[%s1 + $0x30] sm:$0xff]
    %v29 = vld [vmem:[%s1 + $0x38] sm:$0xff]
    %v30 = vld [vmem:[%s2] sm:$0xff]
    %v31 = vld [vmem:[%s2 + $0x8] sm:$0xff]
    %v32 = vld [vmem:[%s2 + $0x10] sm:$0xff]
    %v33 = vld [vmem:[%s2 + $0x18] sm:$0xff]
    %v34 = vld [vmem:[%s2 + $0x20] sm:$0xff]
    %v35 = vld [vmem:[%s2 + $0x28] sm:$0xff]
    %v36 = vld [vmem:[%s2 + $0x30] sm:$0xff]
    %v37 = vld [vmem:[%s2 + $0x38] sm:$0xff]
    %39 = vset.pattern.permute.xlu0 0
    %40 = vperm.xlu0 %39, %v30
    %v41 = vpop.permute.xlu0 %40
    %44 = vset.pattern.permute.xlu0 0
    %45 = vperm.xlu0 %44, %v31
    %v46 = vpop.permute.xlu0 %45
    %49 = vset.pattern.permute.xlu0 0
    %50 = vperm.xlu0 %49, %v32
    %v51 = vpop.permute.xlu0 %50
    %54 = vset.pattern.permute.xlu0 0
    %55 = vperm.xlu0 %54, %v33
    %v56 = vpop.permute.xlu0 %55
    %59 = vset.pattern.permute.xlu0 0
    %60 = vperm.xlu0 %59, %v34
    %v61 = vpop.permute.xlu0 %60
    %64 = vset.pattern.permute.xlu0 0
    %65 = vperm.xlu0 %64, %v35
    %v66 = vpop.permute.xlu0 %65
    %69 = vset.pattern.permute.xlu0 0
    %70 = vperm.xlu0 %69, %v36
    %v71 = vpop.permute.xlu0 %70
    %74 = vset.pattern.permute.xlu0 0
    %75 = vperm.xlu0 %74, %v37
    %v76 = vpop.permute.xlu0 %75
    %vm78 = vcmask 31744
    %v80 = vsel %vm78, %v22, 0
    %v83 = vsel %vm78, %v23, 0
    %v86 = vsel %vm78, %v24, 0
    %v89 = vsel %vm78, %v25, 0
    %v92 = vsel %vm78, %v26, 0
    %v95 = vsel %vm78, %v27, 0
    %v98 = vsel %vm78, %v28, 0
    %v101 = vsel %vm78, %v29, 0
    %vm103 = vcmask 1043456
    %v105 = vsel %vm103, %v21, 0
    %107 = vmatpush.msra.mxu0 0.0
    %108 = vmatpush.msra.mxu0 0.0
    %109 = vmatpush.msra.mxu0 0.0
    %110 = vmatpush.msra.mxu0 0.0
    %111 = vmatpush.msra.mxu0 0.0
    %112 = vmatpush.msra.mxu0 0.0
    %113 = vmatpush.msra.mxu0 0.0
    %114 = vmatpush.msra.mxu0 0.0
    %115 = vmatpush.msra.mxu0 0.0
    %116 = vmatpush.msra.mxu0 0.0
    %117 = vmatpush.msra.mxu0 0.0
    %118 = vmatpush.msra.mxu0 0.0
    %119 = vmatpush.msra.mxu0 0.0
    %120 = vmatpush.msra.mxu0 0.0
    %121 = vmatpush.msra.mxu0 0.0
    %122 = vmatpush.msra.mxu0 %v105
    %123 = vmatmul.f32.gmra.mxu0 %v80
    %v124 = vpop.f32.mrf.mxu0
    %v125 = vadd.f32 %v41, %v124
    %126 = vmatmul.f32.gmra.mxu0 %v83
    %v127 = vpop.f32.mrf.mxu0
    %v128 = vadd.f32 %v46, %v127
    %129 = vmatmul.f32.gmra.mxu0 %v86
    %v130 = vpop.f32.mrf.mxu0
    %v131 = vadd.f32 %v51, %v130
    %132 = vmatmul.f32.gmra.mxu0 %v89
    %v133 = vpop.f32.mrf.mxu0
    %v134 = vadd.f32 %v56, %v133
    %135 = vmatmul.f32.gmra.mxu0 %v92
    %v136 = vpop.f32.mrf.mxu0
    %v137 = vadd.f32 %v61, %v136
    %138 = vmatmul.f32.gmra.mxu0 %v95
    %v139 = vpop.f32.mrf.mxu0
    %v140 = vadd.f32 %v66, %v139
    %141 = vmatmul.f32.gmra.mxu0 %v98
    %v142 = vpop.f32.mrf.mxu0
    %v143 = vadd.f32 %v71, %v142
    %144 = vmatmul.f32.gmra.mxu0 %v101
    %v145 = vpop.f32.mrf.mxu0
    %v146 = vadd.f32 %v76, %v145
    %147 = vdwg.mxu0
    %v148 = vmax.f32 %v125, 0.0
    %v149 = vmax.f32 %v128, 0.0
    %v150 = vmax.f32 %v131, 0.0
    %v151 = vmax.f32 %v134, 0.0
    %v152 = vmax.f32 %v137, 0.0
    %v153 = vmax.f32 %v140, 0.0
    %v154 = vmax.f32 %v143, 0.0
    %v155 = vmax.f32 %v146, 0.0
    %v156 = vld [vmem:[%s3] sm:$0xff]
    %v157 = vld [vmem:[%s4] sm:$0xff]
    %159 = vset.pattern.permute.xlu0 0
    %160 = vperm.xlu0 %159, %v157
    %v161 = vpop.permute.xlu0 %160
    %vm163 = vcmask 523264
    %v165 = vsel %vm163, %v156, 0
    %167 = vmatpush.msra.mxu0 0.0
    %168 = vmatpush.msra.mxu0 0.0
    %169 = vmatpush.msra.mxu0 0.0
    %170 = vmatpush.msra.mxu0 0.0
    %171 = vmatpush.msra.mxu0 0.0
    %172 = vmatpush.msra.mxu0 0.0
    %173 = vmatpush.msra.mxu0 0.0
    %174 = vmatpush.msra.mxu0 0.0
    %175 = vmatpush.msra.mxu0 %v155
    %176 = vmatpush.msra.mxu0 %v154
    %177 = vmatpush.msra.mxu0 %v153
    %178 = vmatpush.msra.mxu0 %v152
    %179 = vmatpush.msra.mxu0 %v151
    %180 = vmatpush.msra.mxu0 %v150
    %181 = vmatpush.msra.mxu0 %v149
    %182 = vmatpush.msra.mxu0 %v148
    %183 = vmatmul.f32.gmra.mxu0 %v165
    %v184 = vpop.f32.mrf.mxu0
    %v185 = vadd.f32 %v161, %v184
    %186 = vdwg.mxu0
    %187 = vst [vmem:[#allocation2] sm:$0xff] %v185
    // Predicated region
    $region22: #{tpu_custom_call.1} parent=1 // pred_check
      _
    $region23: #{tpu_custom_call.1} parent=1 // pred_check_branch
      %189 = sbr.rel (0) target = $region25
    $region24: #{tpu_custom_call.1} parent=1 // pred_region
      %191 = vsyncadd [#allocation3], 0
      %s193 = sshll.u32 [#allocation2], 4
      %s194 = int_to_ptr.vmem [resolvable:$true] %s193
      %s195 = sshll.u32 %s5, 4
      %s196 = int_to_ptr.hbm [resolvable:$true] %s195
      %198 = dma.vmem_to_hbm [thread:$0]  %s194, 128, %s196, [#allocation3]
    $region25: #{tpu_custom_call.1} parent=1 // pred_fallthru
      _
    // Predicated region
    $region26: #{tpu_custom_call.1} parent=1 // pred_check
      _
    $region27: #{tpu_custom_call.1} parent=1 // pred_check_branch
      %200 = sbr.rel (0) target = $region29
    $region28: #{tpu_custom_call.1} parent=1 // pred_region
      %202 = dma.done [#allocation3], 128
    $region29: #{tpu_custom_call.1} parent=1 // pred_fallthru
      _
    %203 = vsyncpa [#allocation3], 1

</llo_original>
